<compile_context>
chip_gen: v7x
topology: tpu7x:2x2x1
jax: 0.10.0
libtpu: 0.0.40
codegen_flags: <defaults>
</compile_context>

<pallas_src>
import jax
import jax.numpy as jnp
from jax import lax
from jax.experimental import pallas as pl
from jax.experimental.pallas import tpu as pltpu

NEURON_CDECAY = 1.0 / 2.0
NEURON_VDECAY = 3.0 / 4.0
NEURON_VTH = 0.5


def _round_up(x, m):
    return ((x + m - 1) // m) * m


def _derive_batch_tiling(B, max_batch_tile):
    """Sublane-aligned batch tile; >= 2 grid blocks when B >= 16 (v7x megacore)."""
    if B >= 16:
        tb_cap = min(max_batch_tile, _round_up(-(-B // 2), 8))
    else:
        tb_cap = max_batch_tile
    num_blocks = max(1, -(-B // tb_cap))
    tb = _round_up(-(-B // num_blocks), 8)
    return tb, num_blocks


def _const_spec(shape):
    """Grid-invariant block: single-buffered when supported (halves its VMEM)."""
    idx = lambda g: (0,) * len(shape)
    try:
        return pl.BlockSpec(shape, idx, pipeline_mode=pl.Buffered(1))
    except (AttributeError, TypeError):
        return pl.BlockSpec(shape, idx)


def _estimate_vmem_limit(spike_ts, tb, in_pad, in_pads, out_pads):
    est = 0
    est += spike_ts * tb * in_pad * 2 * 2                              # x block, bf16, 2 bufs
    est += sum(ip * op * 2 for ip, op in zip(in_pads, out_pads))       # weights, bf16, 1 buf
    est += sum(op * 4 for op in out_pads)                              # biases, f32, 1 buf
    est += spike_ts * tb * out_pads[0] * 4                             # proj0 scratch
    est += sum(tb * op * (4 + 4 + 2) for op in out_pads)               # c/v/s scratch
    est += tb * out_pads[-1] * 4                                       # act scratch
    est += tb * out_pads[-1] * 4 * 2                                   # output block, 2 bufs
    return int(min(max(2 * est + (4 << 20), 32 << 20), 96 << 20))


def make_spike_mlp_kernel(n_layers, spike_ts, tb):
    """Pallas kernel for a SpikeMLP with `n_layers` linear layers
    (hidden layers + output population layer)."""
    f32 = jnp.float32

    def kernel(x_ref, *refs):
        # refs = (w0, b0, ..., w_{n-1}, b_{n-1}, out_ref,
        #         proj0, c0, v0, s0, ..., c_{n-1}, v_{n-1}, s_{n-1}, act)
        n_param = 2 * n_layers
        w_refs = [refs[2 * i] for i in range(n_layers)]
        b_refs = [refs[2 * i + 1] for i in range(n_layers)]
        out_ref = refs[n_param]
        scratch = refs[n_param + 1:]
        proj0_ref = scratch[0]
        c_refs = [scratch[1 + 3 * i + 0] for i in range(n_layers)]
        v_refs = [scratch[1 + 3 * i + 1] for i in range(n_layers)]
        s_refs = [scratch[1 + 3 * i + 2] for i in range(n_layers)]
        act_ref = scratch[1 + 3 * n_layers]

        # Hoisted, state-independent layer-0 projection for ALL timesteps:
        # one (spike_ts*TB, in) @ (in, h0) MXU matmul; bias folded in once.
        proj0_ref[...] = (
            jnp.dot(x_ref[...], w_refs[0][...], preferred_element_type=f32)
            + b_refs[0][...])

        # Fresh LIF state per batch block (the body runs once per grid step).
        for i in range(n_layers):
            c_refs[i][...] = jnp.zeros_like(c_refs[i])
            v_refs[i][...] = jnp.zeros_like(v_refs[i])
            s_refs[i][...] = jnp.zeros_like(s_refs[i])
        act_ref[...] = jnp.zeros_like(act_ref)

        def step(t, carry):
            off = pl.multiple_of(t * tb, tb)
            syn = proj0_ref[pl.ds(off, tb), :]          # W0 @ x_t + b0, f32
            last_s = None
            for i in range(n_layers):
                c = c_refs[i][...] * NEURON_CDECAY + syn
                # v*VDECAY*(1-s) + c == where(s, c, v*VDECAY + c) for finite v.
                v = jnp.where(s_refs[i][...] > 0,
                              c, v_refs[i][...] * NEURON_VDECAY + c)
                s = (v > NEURON_VTH).astype(jnp.bfloat16)   # exact 0/1 in bf16
                c_refs[i][...] = c
                v_refs[i][...] = v
                s_refs[i][...] = s
                last_s = s
                if i + 1 < n_layers:
                    syn = (jnp.dot(s, w_refs[i + 1][...],
                                   preferred_element_type=f32)
                           + b_refs[i + 1][...])
            act_ref[...] = act_ref[...] + last_s.astype(f32)
            return carry

        lax.fori_loop(0, spike_ts, step, 0)

        out_ref[...] = act_ref[...] * (1.0 / spike_ts)

    return kernel


def spike_mlp_forward(in_pop_spikes, weights, biases, *, max_batch_tile=256):
    """
    :param in_pop_spikes: (batch, in_pop_dim, spike_ts) float32 (PyTorch layout)
    :param weights: list of (out_dim, in_dim) arrays (nn.Linear convention)
    :param biases:  list of (out_dim,) arrays
    :return: (batch, out_pop_dim) averaged output-population spike activity
    """
    B, in_dim, spike_ts = in_pop_spikes.shape
    n_layers = len(weights)
    out_dim = weights[-1].shape[0]

    # ---- batch tiling ------------------------------------------------------
    TB, num_blocks = _derive_batch_tiling(B, max_batch_tile)
    Bp = TB * num_blocks

    # ---- feature-dim padding to lane-aligned multiples of 128 --------------
    in_pad = _round_up(in_dim, 128)
    out_dims = [w.shape[0] for w in weights]
    out_pads = [_round_up(d, 128) for d in out_dims]
    in_pads = [in_pad] + out_pads[:-1]

    # ---- input relayout: (B, D, T) -> (G, spike_ts*TB, Dp) bf16 ------------
    # Rows within a block ordered (t, b_local) so the kernel slices proj0[t].
    # TODO(synk): fold this relayout/cast into the upstream population-encoding
    # op to avoid the extra HBM round trip on v5e/v6e.
    x = jnp.asarray(in_pop_spikes, jnp.float32)
    x = jnp.pad(x, ((0, Bp - B), (0, in_pad - in_dim), (0, 0)))
    x = jnp.transpose(x, (2, 0, 1))
    x = (x.reshape(spike_ts, num_blocks, TB, in_pad)
          .transpose(1, 0, 2, 3)
          .reshape(num_blocks, spike_ts * TB, in_pad)
          .astype(jnp.bfloat16))

    args = [x]
    in_specs = [pl.BlockSpec((None, spike_ts * TB, in_pad), lambda g: (g, 0, 0))]
    for w, b, ip, op in zip(weights, biases, in_pads, out_pads):
        wt = jnp.asarray(w, jnp.float32).T                        # (in, out)
        wt = jnp.pad(wt, ((0, ip - wt.shape[0]), (0, op - wt.shape[1])))
        wt = wt.astype(jnp.bfloat16)
        bb = jnp.pad(jnp.asarray(b, jnp.float32),
                     (0, op - b.shape[0])).reshape(1, op)
        args += [wt, bb]
        in_specs += [_const_spec(wt.shape), _const_spec(bb.shape)]

    scratch_shapes = [pltpu.VMEM((spike_ts * TB, out_pads[0]), jnp.float32)]
    for op in out_pads:
        scratch_shapes += [pltpu.VMEM((TB, op), jnp.float32),     # current
                           pltpu.VMEM((TB, op), jnp.float32),     # volt
                           pltpu.VMEM((TB, op), jnp.bfloat16)]    # spike
    scratch_shapes += [pltpu.VMEM((TB, out_pads[-1]), jnp.float32)]  # act

    vmem_limit = _estimate_vmem_limit(spike_ts, TB, in_pad, in_pads, out_pads)

    kernel = make_spike_mlp_kernel(n_layers, spike_ts, TB)

    out = pl.pallas_call(
        kernel,
        out_shape=jax.ShapeDtypeStruct((Bp, out_pads[-1]), jnp.float32),
        grid=(num_blocks,),
        in_specs=in_specs,
        out_specs=pl.BlockSpec((TB, out_pads[-1]), lambda g: (g, 0)),
        scratch_shapes=scratch_shapes,
        compiler_params=pltpu.CompilerParams(
            dimension_semantics=("parallel",),        # megacore split on v7x
            vmem_limit_bytes=vmem_limit),
    )(*args)
    return out[:B, :out_dim]


def spike_mlp_reference(in_pop_spikes, weights, biases):
    """Pure-JAX reference mirroring the PyTorch forward exactly, using the same
    numerics convention as the kernel (bf16 MXU operands — lossless for the
    0/1 spikes, weights rounded once — with f32 accumulation / state math)."""
    B, in_dim, spike_ts = in_pop_spikes.shape
    n_layers = len(weights)
    dims = [w.shape[0] for w in weights]

    w_bf = [jnp.asarray(w, jnp.float32).T.astype(jnp.bfloat16) for w in weights]
    b_f = [jnp.asarray(b, jnp.float32) for b in biases]

    states = [[jnp.zeros((B, d), jnp.float32) for _ in range(3)] for d in dims]
    act = jnp.zeros((B, dims[-1]), jnp.float32)

    for t in range(spike_ts):
        pre = in_pop_spikes[:, :, t].astype(jnp.bfloat16)
        for i in range(n_layers):
            c, v, s = states[i]
            c = c * NEURON_CDECAY + (
                jnp.dot(pre, w_bf[i], preferred_element_type=jnp.float32) + b_f[i])
            v = v * NEURON_VDECAY * (1.0 - s) + c
            s = (v > NEURON_VTH).astype(jnp.float32)
            states[i] = [c, v, s]
            pre = s.astype(jnp.bfloat16)
        act = act + states[-1][2]
    return act / float(spike_ts)


if __name__ == "__main__":
    # Small, deterministic configuration.
    batch = 2
    in_pop_dim = 32
    hidden_sizes = [32, 32]
    out_pop_dim = 32
    spike_ts = 8

    key = jax.random.PRNGKey(0)
    k_x, k_w = jax.random.split(key)

    # Binary input population spikes, shape (batch, in_pop_dim, spike_ts).
    in_pop_spikes = jax.random.bernoulli(
        k_x, p=0.5, shape=(batch, in_pop_dim, spike_ts)
    ).astype(jnp.float32)

    # Deterministic parameter init (nn.Linear shapes: (out, in) + (out,)).
    layer_dims = [in_pop_dim] + list(hidden_sizes) + [out_pop_dim]
    weights, biases = [], []
    for i in range(len(layer_dims) - 1):
        fan_in, fan_out = layer_dims[i], layer_dims[i + 1]
        k_w, kw_i, kb_i = jax.random.split(k_w, 3)
        bound = 1.0 / (fan_in ** 0.5)
        weights.append(jax.random.uniform(kw_i, (fan_out, fan_in), jnp.float32,
                                          minval=-bound, maxval=bound))
        biases.append(jax.random.uniform(kb_i, (fan_out,), jnp.float32,
                                         minval=-bound, maxval=bound))

    # jit the wrapper so the input relayout fuses with the pallas_call region.
    fwd = jax.jit(spike_mlp_forward)
    out = jax.block_until_ready(fwd(in_pop_spikes, weights, biases))

    ref = jax.block_until_ready(
        spike_mlp_reference(in_pop_spikes, weights, biases))

    assert out.shape == (batch, out_pop_dim)
    assert jnp.allclose(out, ref, atol=1e-5, rtol=1e-5), \
        "Pallas kernel mismatch vs reference"

    print("KERNEL_OK")
</pallas_src>

<mosaic_0001>
module attributes {stable_mosaic.version = 11 : i64} {
  func.func @kernel(%arg0: i32, %arg1: memref<1x64x128xbf16, #tpu.memory_space<vmem>>, %arg2: memref<128x128xbf16, #tpu.memory_space<vmem>>, %arg3: memref<1x128xf32, #tpu.memory_space<vmem>>, %arg4: memref<128x128xbf16, #tpu.memory_space<vmem>>, %arg5: memref<1x128xf32, #tpu.memory_space<vmem>>, %arg6: memref<128x128xbf16, #tpu.memory_space<vmem>>, %arg7: memref<1x128xf32, #tpu.memory_space<vmem>>, %arg8: memref<8x128xf32, #tpu.memory_space<vmem>>, %arg9: memref<64x128xf32, #tpu.memory_space<vmem>>, %arg10: memref<8x128xf32, #tpu.memory_space<vmem>>, %arg11: memref<8x128xf32, #tpu.memory_space<vmem>>, %arg12: memref<8x128xbf16, #tpu.memory_space<vmem>>, %arg13: memref<8x128xf32, #tpu.memory_space<vmem>>, %arg14: memref<8x128xf32, #tpu.memory_space<vmem>>, %arg15: memref<8x128xbf16, #tpu.memory_space<vmem>>, %arg16: memref<8x128xf32, #tpu.memory_space<vmem>>, %arg17: memref<8x128xf32, #tpu.memory_space<vmem>>, %arg18: memref<8x128xbf16, #tpu.memory_space<vmem>>, %arg19: memref<8x128xf32, #tpu.memory_space<vmem>>) attributes {dimension_semantics = [#tpu.dimension_semantics<parallel>], iteration_bounds = array<i64: 1>, scalar_prefetch = 0 : i64, scratch_operands = 11 : i64, tpu.core_type = #tpu.core_type<tc>, window_params = [{transform_indices = @transform_0, window_bounds = array<i64: 1, 64, 128>}, {pipeline_mode = #tpu.pipeline_mode<synchronous>, transform_indices = @transform_1, window_bounds = array<i64: 128, 128>}, {pipeline_mode = #tpu.pipeline_mode<synchronous>, transform_indices = @transform_2, window_bounds = array<i64: 1, 128>}, {pipeline_mode = #tpu.pipeline_mode<synchronous>, transform_indices = @transform_3, window_bounds = array<i64: 128, 128>}, {pipeline_mode = #tpu.pipeline_mode<synchronous>, transform_indices = @transform_4, window_bounds = array<i64: 1, 128>}, {pipeline_mode = #tpu.pipeline_mode<synchronous>, transform_indices = @transform_5, window_bounds = array<i64: 128, 128>}, {pipeline_mode = #tpu.pipeline_mode<synchronous>, transform_indices = @transform_6, window_bounds = array<i64: 1, 128>}, {transform_indices = @transform_7, window_bounds = array<i64: 8, 128>}]} {
    %c0 = arith.constant 0 : index
    %c0_0 = arith.constant 0 : index
    %c0_1 = arith.constant 0 : index
    %0 = vector.load %arg1[%c0, %c0_0, %c0_1] : memref<1x64x128xbf16, #tpu.memory_space<vmem>>, vector<1x64x128xbf16>
    %1 = vector.shape_cast %0 : vector<1x64x128xbf16> to vector<64x128xbf16>
    %c0_2 = arith.constant 0 : index
    %c0_3 = arith.constant 0 : index
    %2 = vector.load %arg2[%c0_2, %c0_3] : memref<128x128xbf16, #tpu.memory_space<vmem>>, vector<128x128xbf16>
    %cst = arith.constant dense<0.000000e+00> : vector<64x128xf32>
    %3 = tpu.matmul %1, %2, %cst {dimension_numbers = #tpu.dot_dimension_numbers<[1], [0], [0], [1], [0, 0, 1, 1], [], []>} : vector<64x128xbf16>, vector<128x128xbf16>, vector<64x128xf32> -> vector<64x128xf32>
    %c0_4 = arith.constant 0 : index
    %c0_5 = arith.constant 0 : index
    %4 = vector.load %arg3[%c0_4, %c0_5] : memref<1x128xf32, #tpu.memory_space<vmem>>, vector<1x128xf32>
    %5 = vector.broadcast %4 : vector<1x128xf32> to vector<64x128xf32>
    %6 = arith.addf %3, %5 : vector<64x128xf32>
    %c0_6 = arith.constant 0 : index
    %c0_7 = arith.constant 0 : index
    %7 = vector.load %arg9[%c0_6, %c0_7] : memref<64x128xf32, #tpu.memory_space<vmem>>, vector<64x128xf32>
    tpu.vector_store %arg9[%c0_6, %c0_7], %6 {strides = array<i32>} : memref<64x128xf32, #tpu.memory_space<vmem>>, vector<64x128xf32>,
    %cst_8 = arith.constant 0.000000e+00 : f32
    %8 = vector.broadcast %cst_8 : f32 to vector<8x128xf32>
    %c0_9 = arith.constant 0 : index
    %c0_10 = arith.constant 0 : index
    %9 = vector.load %arg10[%c0_9, %c0_10] : memref<8x128xf32, #tpu.memory_space<vmem>>, vector<8x128xf32>
    tpu.vector_store %arg10[%c0_9, %c0_10], %8 {strides = array<i32>} : memref<8x128xf32, #tpu.memory_space<vmem>>, vector<8x128xf32>,
    %cst_11 = arith.constant 0.000000e+00 : f32
    %10 = vector.broadcast %cst_11 : f32 to vector<8x128xf32>
    %c0_12 = arith.constant 0 : index
    %c0_13 = arith.constant 0 : index
    %11 = vector.load %arg11[%c0_12, %c0_13] : memref<8x128xf32, #tpu.memory_space<vmem>>, vector<8x128xf32>
    tpu.vector_store %arg11[%c0_12, %c0_13], %10 {strides = array<i32>} : memref<8x128xf32, #tpu.memory_space<vmem>>, vector<8x128xf32>,
    %cst_14 = arith.constant 0.000000e+00 : bf16
    %12 = vector.broadcast %cst_14 : bf16 to vector<8x128xbf16>
    %c0_15 = arith.constant 0 : index
    %c0_16 = arith.constant 0 : index
    %13 = vector.load %arg12[%c0_15, %c0_16] : memref<8x128xbf16, #tpu.memory_space<vmem>>, vector<8x128xbf16>
    tpu.vector_store %arg12[%c0_15, %c0_16], %12 {strides = array<i32>} : memref<8x128xbf16, #tpu.memory_space<vmem>>, vector<8x128xbf16>,
    %cst_17 = arith.constant 0.000000e+00 : f32
    %14 = vector.broadcast %cst_17 : f32 to vector<8x128xf32>
    %c0_18 = arith.constant 0 : index
    %c0_19 = arith.constant 0 : index
    %15 = vector.load %arg13[%c0_18, %c0_19] : memref<8x128xf32, #tpu.memory_space<vmem>>, vector<8x128xf32>
    tpu.vector_store %arg13[%c0_18, %c0_19], %14 {strides = array<i32>} : memref<8x128xf32, #tpu.memory_space<vmem>>, vector<8x128xf32>,
    %cst_20 = arith.constant 0.000000e+00 : f32
    %16 = vector.broadcast %cst_20 : f32 to vector<8x128xf32>
    %c0_21 = arith.constant 0 : index
    %c0_22 = arith.constant 0 : index
    %17 = vector.load %arg14[%c0_21, %c0_22] : memref<8x128xf32, #tpu.memory_space<vmem>>, vector<8x128xf32>
    tpu.vector_store %arg14[%c0_21, %c0_22], %16 {strides = array<i32>} : memref<8x128xf32, #tpu.memory_space<vmem>>, vector<8x128xf32>,
    %cst_23 = arith.constant 0.000000e+00 : bf16
    %18 = vector.broadcast %cst_23 : bf16 to vector<8x128xbf16>
    %c0_24 = arith.constant 0 : index
    %c0_25 = arith.constant 0 : index
    %19 = vector.load %arg15[%c0_24, %c0_25] : memref<8x128xbf16, #tpu.memory_space<vmem>>, vector<8x128xbf16>
    tpu.vector_store %arg15[%c0_24, %c0_25], %18 {strides = array<i32>} : memref<8x128xbf16, #tpu.memory_space<vmem>>, vector<8x128xbf16>,
    %cst_26 = arith.constant 0.000000e+00 : f32
    %20 = vector.broadcast %cst_26 : f32 to vector<8x128xf32>
    %c0_27 = arith.constant 0 : index
    %c0_28 = arith.constant 0 : index
    %21 = vector.load %arg16[%c0_27, %c0_28] : memref<8x128xf32, #tpu.memory_space<vmem>>, vector<8x128xf32>
    tpu.vector_store %arg16[%c0_27, %c0_28], %20 {strides = array<i32>} : memref<8x128xf32, #tpu.memory_space<vmem>>, vector<8x128xf32>,
    %cst_29 = arith.constant 0.000000e+00 : f32
    %22 = vector.broadcast %cst_29 : f32 to vector<8x128xf32>
    %c0_30 = arith.constant 0 : index
    %c0_31 = arith.constant 0 : index
    %23 = vector.load %arg17[%c0_30, %c0_31] : memref<8x128xf32, #tpu.memory_space<vmem>>, vector<8x128xf32>
    tpu.vector_store %arg17[%c0_30, %c0_31], %22 {strides = array<i32>} : memref<8x128xf32, #tpu.memory_space<vmem>>, vector<8x128xf32>,
    %cst_32 = arith.constant 0.000000e+00 : bf16
    %24 = vector.broadcast %cst_32 : bf16 to vector<8x128xbf16>
    %c0_33 = arith.constant 0 : index
    %c0_34 = arith.constant 0 : index
    %25 = vector.load %arg18[%c0_33, %c0_34] : memref<8x128xbf16, #tpu.memory_space<vmem>>, vector<8x128xbf16>
    tpu.vector_store %arg18[%c0_33, %c0_34], %24 {strides = array<i32>} : memref<8x128xbf16, #tpu.memory_space<vmem>>, vector<8x128xbf16>,
    %cst_35 = arith.constant 0.000000e+00 : f32
    %26 = vector.broadcast %cst_35 : f32 to vector<8x128xf32>
    %c0_36 = arith.constant 0 : index
    %c0_37 = arith.constant 0 : index
    %27 = vector.load %arg19[%c0_36, %c0_37] : memref<8x128xf32, #tpu.memory_space<vmem>>, vector<8x128xf32>
    tpu.vector_store %arg19[%c0_36, %c0_37], %26 {strides = array<i32>} : memref<8x128xf32, #tpu.memory_space<vmem>>, vector<8x128xf32>,
    %c0_i32 = arith.constant 0 : i32
    %c8_i32 = arith.constant 8 : i32
    %28 = arith.addi %c0_i32, %c8_i32 : i32
    %c1_i32 = arith.constant 1 : i32
    scf.for %arg20 = %c0_i32 to %28 step %c1_i32  : i32 {
      %c8_i32_44 = arith.constant 8 : i32
      %33 = arith.muli %arg20, %c8_i32_44 : i32
      %34 = tpu.assume_multiple %33, 8 : i32
      %35 = arith.index_cast %34 : i32 to index
      %c0_45 = arith.constant 0 : index
      %36 = vector.load %arg9[%35, %c0_45] : memref<64x128xf32, #tpu.memory_space<vmem>>, vector<8x128xf32>
      %c0_46 = arith.constant 0 : index
      %c0_47 = arith.constant 0 : index
      %37 = vector.load %arg10[%c0_46, %c0_47] : memref<8x128xf32, #tpu.memory_space<vmem>>, vector<8x128xf32>
      %cst_48 = arith.constant 5.000000e-01 : f32
      %38 = vector.broadcast %cst_48 : f32 to vector<8x128xf32>
      %39 = arith.mulf %37, %38 : vector<8x128xf32>
      %40 = arith.addf %39, %36 : vector<8x128xf32>
      %c0_49 = arith.constant 0 : index
      %c0_50 = arith.constant 0 : index
      %41 = vector.load %arg12[%c0_49, %c0_50] : memref<8x128xbf16, #tpu.memory_space<vmem>>, vector<8x128xbf16>
      %cst_51 = arith.constant 0.000000e+00 : bf16
      %42 = vector.broadcast %cst_51 : bf16 to vector<8x128xbf16>
      %43 = arith.cmpf ogt, %41, %42 : vector<8x128xbf16>
      %c0_52 = arith.constant 0 : index
      %c0_53 = arith.constant 0 : index
      %44 = vector.load %arg11[%c0_52, %c0_53] : memref<8x128xf32, #tpu.memory_space<vmem>>, vector<8x128xf32>
      %cst_54 = arith.constant 7.500000e-01 : f32
      %45 = vector.broadcast %cst_54 : f32 to vector<8x128xf32>
      %46 = arith.mulf %44, %45 : vector<8x128xf32>
      %47 = arith.addf %46, %40 : vector<8x128xf32>
      %48 = arith.select %43, %40, %47 : vector<8x128xi1>, vector<8x128xf32>
      %cst_55 = arith.constant 5.000000e-01 : f32
      %49 = vector.broadcast %cst_55 : f32 to vector<8x128xf32>
      %50 = arith.cmpf ogt, %48, %49 : vector<8x128xf32>
      %51 = arith.extui %50 : vector<8x128xi1> to vector<8x128xi32>
      %52 = arith.sitofp %51 : vector<8x128xi32> to vector<8x128xf32>
      %53 = arith.truncf %52 : vector<8x128xf32> to vector<8x128xbf16>
      %c0_56 = arith.constant 0 : index
      %c0_57 = arith.constant 0 : index
      %54 = vector.load %arg10[%c0_56, %c0_57] : memref<8x128xf32, #tpu.memory_space<vmem>>, vector<8x128xf32>
      tpu.vector_store %arg10[%c0_56, %c0_57], %40 {strides = array<i32>} : memref<8x128xf32, #tpu.memory_space<vmem>>, vector<8x128xf32>,
      %c0_58 = arith.constant 0 : index
      %c0_59 = arith.constant 0 : index
      %55 = vector.load %arg11[%c0_58, %c0_59] : memref<8x128xf32, #tpu.memory_space<vmem>>, vector<8x128xf32>
      tpu.vector_store %arg11[%c0_58, %c0_59], %48 {strides = array<i32>} : memref<8x128xf32, #tpu.memory_space<vmem>>, vector<8x128xf32>,
      %c0_60 = arith.constant 0 : index
      %c0_61 = arith.constant 0 : index
      %56 = vector.load %arg12[%c0_60, %c0_61] : memref<8x128xbf16, #tpu.memory_space<vmem>>, vector<8x128xbf16>
      tpu.vector_store %arg12[%c0_60, %c0_61], %53 {strides = array<i32>} : memref<8x128xbf16, #tpu.memory_space<vmem>>, vector<8x128xbf16>,
      %c0_62 = arith.constant 0 : index
      %c0_63 = arith.constant 0 : index
      %57 = vector.load %arg4[%c0_62, %c0_63] : memref<128x128xbf16, #tpu.memory_space<vmem>>, vector<128x128xbf16>
      %cst_64 = arith.constant dense<0.000000e+00> : vector<8x128xf32>
      %58 = tpu.matmul %53, %57, %cst_64 {dimension_numbers = #tpu.dot_dimension_numbers<[1], [0], [0], [1], [0, 0, 1, 1], [], []>} : vector<8x128xbf16>, vector<128x128xbf16>, vector<8x128xf32> -> vector<8x128xf32>
      %c0_65 = arith.constant 0 : index
      %c0_66 = arith.constant 0 : index
      %59 = vector.load %arg5[%c0_65, %c0_66] : memref<1x128xf32, #tpu.memory_space<vmem>>, vector<1x128xf32>
      %60 = vector.broadcast %59 : vector<1x128xf32> to vector<8x128xf32>
      %61 = arith.addf %58, %60 : vector<8x128xf32>
      %c0_67 = arith.constant 0 : index
      %c0_68 = arith.constant 0 : index
      %62 = vector.load %arg13[%c0_67, %c0_68] : memref<8x128xf32, #tpu.memory_space<vmem>>, vector<8x128xf32>
      %cst_69 = arith.constant 5.000000e-01 : f32
      %63 = vector.broadcast %cst_69 : f32 to vector<8x128xf32>
      %64 = arith.mulf %62, %63 : vector<8x128xf32>
      %65 = arith.addf %64, %61 : vector<8x128xf32>
      %c0_70 = arith.constant 0 : index
      %c0_71 = arith.constant 0 : index
      %66 = vector.load %arg15[%c0_70, %c0_71] : memref<8x128xbf16, #tpu.memory_space<vmem>>, vector<8x128xbf16>
      %cst_72 = arith.constant 0.000000e+00 : bf16
      %67 = vector.broadcast %cst_72 : bf16 to vector<8x128xbf16>
      %68 = arith.cmpf ogt, %66, %67 : vector<8x128xbf16>
      %c0_73 = arith.constant 0 : index
      %c0_74 = arith.constant 0 : index
      %69 = vector.load %arg14[%c0_73, %c0_74] : memref<8x128xf32, #tpu.memory_space<vmem>>, vector<8x128xf32>
      %cst_75 = arith.constant 7.500000e-01 : f32
      %70 = vector.broadcast %cst_75 : f32 to vector<8x128xf32>
      %71 = arith.mulf %69, %70 : vector<8x128xf32>
      %72 = arith.addf %71, %65 : vector<8x128xf32>
      %73 = arith.select %68, %65, %72 : vector<8x128xi1>, vector<8x128xf32>
      %cst_76 = arith.constant 5.000000e-01 : f32
      %74 = vector.broadcast %cst_76 : f32 to vector<8x128xf32>
      %75 = arith.cmpf ogt, %73, %74 : vector<8x128xf32>
      %76 = arith.extui %75 : vector<8x128xi1> to vector<8x128xi32>
      %77 = arith.sitofp %76 : vector<8x128xi32> to vector<8x128xf32>
      %78 = arith.truncf %77 : vector<8x128xf32> to vector<8x128xbf16>
      %c0_77 = arith.constant 0 : index
      %c0_78 = arith.constant 0 : index
      %79 = vector.load %arg13[%c0_77, %c0_78] : memref<8x128xf32, #tpu.memory_space<vmem>>, vector<8x128xf32>
      tpu.vector_store %arg13[%c0_77, %c0_78], %65 {strides = array<i32>} : memref<8x128xf32, #tpu.memory_space<vmem>>, vector<8x128xf32>,
      %c0_79 = arith.constant 0 : index
      %c0_80 = arith.constant 0 : index
      %80 = vector.load %arg14[%c0_79, %c0_80] : memref<8x128xf32, #tpu.memory_space<vmem>>, vector<8x128xf32>
      tpu.vector_store %arg14[%c0_79, %c0_80], %73 {strides = array<i32>} : memref<8x128xf32, #tpu.memory_space<vmem>>, vector<8x128xf32>,
      %c0_81 = arith.constant 0 : index
      %c0_82 = arith.constant 0 : index
      %81 = vector.load %arg15[%c0_81, %c0_82] : memref<8x128xbf16, #tpu.memory_space<vmem>>, vector<8x128xbf16>
      tpu.vector_store %arg15[%c0_81, %c0_82], %78 {strides = array<i32>} : memref<8x128xbf16, #tpu.memory_space<vmem>>, vector<8x128xbf16>,
      %c0_83 = arith.constant 0 : index
      %c0_84 = arith.constant 0 : index
      %82 = vector.load %arg6[%c0_83, %c0_84] : memref<128x128xbf16, #tpu.memory_space<vmem>>, vector<128x128xbf16>
      %cst_85 = arith.constant dense<0.000000e+00> : vector<8x128xf32>
      %83 = tpu.matmul %78, %82, %cst_85 {dimension_numbers = #tpu.dot_dimension_numbers<[1], [0], [0], [1], [0, 0, 1, 1], [], []>} : vector<8x128xbf16>, vector<128x128xbf16>, vector<8x128xf32> -> vector<8x128xf32>
      %c0_86 = arith.constant 0 : index
      %c0_87 = arith.constant 0 : index
      %84 = vector.load %arg7[%c0_86, %c0_87] : memref<1x128xf32, #tpu.memory_space<vmem>>, vector<1x128xf32>
      %85 = vector.broadcast %84 : vector<1x128xf32> to vector<8x128xf32>
      %86 = arith.addf %83, %85 : vector<8x128xf32>
      %c0_88 = arith.constant 0 : index
      %c0_89 = arith.constant 0 : index
      %87 = vector.load %arg16[%c0_88, %c0_89] : memref<8x128xf32, #tpu.memory_space<vmem>>, vector<8x128xf32>
      %cst_90 = arith.constant 5.000000e-01 : f32
      %88 = vector.broadcast %cst_90 : f32 to vector<8x128xf32>
      %89 = arith.mulf %87, %88 : vector<8x128xf32>
      %90 = arith.addf %89, %86 : vector<8x128xf32>
      %c0_91 = arith.constant 0 : index
      %c0_92 = arith.constant 0 : index
      %91 = vector.load %arg18[%c0_91, %c0_92] : memref<8x128xbf16, #tpu.memory_space<vmem>>, vector<8x128xbf16>
      %cst_93 = arith.constant 0.000000e+00 : bf16
      %92 = vector.broadcast %cst_93 : bf16 to vector<8x128xbf16>
      %93 = arith.cmpf ogt, %91, %92 : vector<8x128xbf16>
      %c0_94 = arith.constant 0 : index
      %c0_95 = arith.constant 0 : index
      %94 = vector.load %arg17[%c0_94, %c0_95] : memref<8x128xf32, #tpu.memory_space<vmem>>, vector<8x128xf32>
      %cst_96 = arith.constant 7.500000e-01 : f32
      %95 = vector.broadcast %cst_96 : f32 to vector<8x128xf32>
      %96 = arith.mulf %94, %95 : vector<8x128xf32>
      %97 = arith.addf %96, %90 : vector<8x128xf32>
      %98 = arith.select %93, %90, %97 : vector<8x128xi1>, vector<8x128xf32>
      %cst_97 = arith.constant 5.000000e-01 : f32
      %99 = vector.broadcast %cst_97 : f32 to vector<8x128xf32>
      %100 = arith.cmpf ogt, %98, %99 : vector<8x128xf32>
      %101 = arith.extui %100 : vector<8x128xi1> to vector<8x128xi32>
      %102 = arith.sitofp %101 : vector<8x128xi32> to vector<8x128xf32>
      %103 = arith.truncf %102 : vector<8x128xf32> to vector<8x128xbf16>
      %c0_98 = arith.constant 0 : index
      %c0_99 = arith.constant 0 : index
      %104 = vector.load %arg16[%c0_98, %c0_99] : memref<8x128xf32, #tpu.memory_space<vmem>>, vector<8x128xf32>
      tpu.vector_store %arg16[%c0_98, %c0_99], %90 {strides = array<i32>} : memref<8x128xf32, #tpu.memory_space<vmem>>, vector<8x128xf32>,
      %c0_100 = arith.constant 0 : index
      %c0_101 = arith.constant 0 : index
      %105 = vector.load %arg17[%c0_100, %c0_101] : memref<8x128xf32, #tpu.memory_space<vmem>>, vector<8x128xf32>
      tpu.vector_store %arg17[%c0_100, %c0_101], %98 {strides = array<i32>} : memref<8x128xf32, #tpu.memory_space<vmem>>, vector<8x128xf32>,
      %c0_102 = arith.constant 0 : index
      %c0_103 = arith.constant 0 : index
      %106 = vector.load %arg18[%c0_102, %c0_103] : memref<8x128xbf16, #tpu.memory_space<vmem>>, vector<8x128xbf16>
      tpu.vector_store %arg18[%c0_102, %c0_103], %103 {strides = array<i32>} : memref<8x128xbf16, #tpu.memory_space<vmem>>, vector<8x128xbf16>,
      %c0_104 = arith.constant 0 : index
      %c0_105 = arith.constant 0 : index
      %107 = vector.load %arg19[%c0_104, %c0_105] : memref<8x128xf32, #tpu.memory_space<vmem>>, vector<8x128xf32>
      %108 = arith.extf %103 : vector<8x128xbf16> to vector<8x128xf32>
      %109 = arith.addf %107, %108 : vector<8x128xf32>
      %c0_106 = arith.constant 0 : index
      %c0_107 = arith.constant 0 : index
      %110 = vector.load %arg19[%c0_106, %c0_107] : memref<8x128xf32, #tpu.memory_space<vmem>>, vector<8x128xf32>
      tpu.vector_store %arg19[%c0_106, %c0_107], %109 {strides = array<i32>} : memref<8x128xf32, #tpu.memory_space<vmem>>, vector<8x128xf32>,
    }
    %c8_i32_38 = arith.constant 8 : i32
    %c0_39 = arith.constant 0 : index
    %c0_40 = arith.constant 0 : index
    %29 = vector.load %arg19[%c0_39, %c0_40] : memref<8x128xf32, #tpu.memory_space<vmem>>, vector<8x128xf32>
    %cst_41 = arith.constant 1.250000e-01 : f32
    %30 = vector.broadcast %cst_41 : f32 to vector<8x128xf32>
    %31 = arith.mulf %29, %30 : vector<8x128xf32>
    %c0_42 = arith.constant 0 : index
    %c0_43 = arith.constant 0 : index
    %32 = vector.load %arg8[%c0_42, %c0_43] : memref<8x128xf32, #tpu.memory_space<vmem>>, vector<8x128xf32>
    tpu.vector_store %arg8[%c0_42, %c0_43], %31 {strides = array<i32>} : memref<8x128xf32, #tpu.memory_space<vmem>>, vector<8x128xf32>,
    return
  }
  func.func @transform_0(%arg0: i32) -> (i32, i32, i32) {
    %c0_i32 = arith.constant 0 : i32
    %c0_i32_0 = arith.constant 0 : i32
    %c0_i32_1 = arith.constant 0 : i32
    return %arg0, %c0_i32, %c0_i32_0 : i32, i32, i32
  }
  func.func @transform_1(%arg0: i32) -> (i32, i32) {
    %c0_i32 = arith.constant 0 : i32
    %c0_i32_0 = arith.constant 0 : i32
    %c0_i32_1 = arith.constant 0 : i32
    return %c0_i32, %c0_i32_0 : i32, i32
  }
  func.func @transform_2(%arg0: i32) -> (i32, i32) {
    %c0_i32 = arith.constant 0 : i32
    %c0_i32_0 = arith.constant 0 : i32
    %c0_i32_1 = arith.constant 0 : i32
    return %c0_i32, %c0_i32_0 : i32, i32
  }
  func.func @transform_3(%arg0: i32) -> (i32, i32) {
    %c0_i32 = arith.constant 0 : i32
    %c0_i32_0 = arith.constant 0 : i32
    %c0_i32_1 = arith.constant 0 : i32
    return %c0_i32, %c0_i32_0 : i32, i32
  }
  func.func @transform_4(%arg0: i32) -> (i32, i32) {
    %c0_i32 = arith.constant 0 : i32
    %c0_i32_0 = arith.constant 0 : i32
    %c0_i32_1 = arith.constant 0 : i32
    return %c0_i32, %c0_i32_0 : i32, i32
  }
  func.func @transform_5(%arg0: i32) -> (i32, i32) {
    %c0_i32 = arith.constant 0 : i32
    %c0_i32_0 = arith.constant 0 : i32
    %c0_i32_1 = arith.constant 0 : i32
    return %c0_i32, %c0_i32_0 : i32, i32
  }
  func.func @transform_6(%arg0: i32) -> (i32, i32) {
    %c0_i32 = arith.constant 0 : i32
    %c0_i32_0 = arith.constant 0 : i32
    %c0_i32_1 = arith.constant 0 : i32
    return %c0_i32, %c0_i32_0 : i32, i32
  }
  func.func @transform_7(%arg0: i32) -> (i32, i32) {
    %c0_i32 = arith.constant 0 : i32
    %c0_i32_0 = arith.constant 0 : i32
    return %arg0, %c0_i32 : i32, i32
  }
}

</mosaic_0001>

<llo_original>
// kernel: spike_mlp_forward.1
$region0: #{spike_mlp_forward.1}
  #allocation0 [shape = 'u32[]', space=smem, size = 0x4, offset = 0x4, fixed_abs, tag = 'smem constant byte address 0x4 - core index']
  #allocation1 [shape = 'u32[144,128]{1,0:T(1,128)}', space=vmem, size = 0x12000, scoped, tag = 'internal scratch']
  #allocation2 [shape = 'f32[64,128]{1,0:T(8,128)}', space=vmem, size = 0x8000, scoped, tag = 'scratch operand']
  #allocation3 [shape = 'f32[8,128]{1,0:T(8,128)}', space=vmem, size = 0x1000, scoped, tag = 'scratch operand']
  #allocation4 [shape = 'f32[8,128]{1,0:T(8,128)}', space=vmem, size = 0x1000, scoped, tag = 'scratch operand']
  #allocation5 [shape = 'bf16[8,128]{1,0:T(8,128)(2,1)}', space=vmem, size = 0x800, scoped, tag = 'scratch operand']
  #allocation6 [shape = 'f32[8,128]{1,0:T(8,128)}', space=vmem, size = 0x1000, scoped, tag = 'scratch operand']
  #allocation7 [shape = 'f32[8,128]{1,0:T(8,128)}', space=vmem, size = 0x1000, scoped, tag = 'scratch operand']
  #allocation8 [shape = 'bf16[8,128]{1,0:T(8,128)(2,1)}', space=vmem, size = 0x800, scoped, tag = 'scratch operand']
  #allocation9 [shape = 'f32[8,128]{1,0:T(8,128)}', space=vmem, size = 0x1000, scoped, tag = 'scratch operand']
  #allocation10 [shape = 'f32[8,128]{1,0:T(8,128)}', space=vmem, size = 0x1000, scoped, tag = 'scratch operand']
  #allocation11 [shape = 'bf16[8,128]{1,0:T(8,128)(2,1)}', space=vmem, size = 0x800, scoped, tag = 'scratch operand']
  #allocation12 [shape = 'f32[8,128]{1,0:T(8,128)}', space=vmem, size = 0x1000, scoped, tag = 'scratch operand']
  %s0 = inlined_call_operand.vmem [shape: bf16[1,64,128], index: 0, kind: input, shape index: {}]
  %s1 = inlined_call_operand.vmem [shape: bf16[128,128], index: 1, kind: input, shape index: {}]
  %s2 = inlined_call_operand.vmem [shape: f32[1,128], index: 2, kind: input, shape index: {}]
  %s3 = inlined_call_operand.vmem [shape: bf16[128,128], index: 3, kind: input, shape index: {}]
  %s4 = inlined_call_operand.vmem [shape: f32[1,128], index: 4, kind: input, shape index: {}]
  %s5 = inlined_call_operand.vmem [shape: bf16[128,128], index: 5, kind: input, shape index: {}]
  %s6 = inlined_call_operand.vmem [shape: f32[1,128], index: 6, kind: input, shape index: {}]
  %s7 = inlined_call_operand.vmem [shape: f32[8,128], index: 7, kind: output, shape index: {}]
  %s8 = sld [smem:[#allocation0]]
  $region45: #{spike_mlp_forward.1} parent=0
    _
  %s10 = ssub.s32 1, %s8
  %s11 = scalar_select 0, %s10, %s8
  // Predicated region
  $region2: #{spike_mlp_forward.1} parent=0 // pred_check
    _
  $region3: #{spike_mlp_forward.1} parent=0 // pred_check_branch
    %13 = sbr.rel (0) target = $region5
  $region4: #{spike_mlp_forward.1} parent=0 // pred_region
    _
  $region5: #{spike_mlp_forward.1} parent=0 // pred_fallthru
    _
  // Predicated region
  $region6: #{spike_mlp_forward.1} parent=0 // pred_check
    _
  $region7: #{spike_mlp_forward.1} parent=0 // pred_check_branch
    %15 = sbr.rel (0) target = $region9
  $region8: #{spike_mlp_forward.1} parent=0 // pred_region
    _
  $region9: #{spike_mlp_forward.1} parent=0 // pred_fallthru
    _
  // Predicated region
  $region10: #{spike_mlp_forward.1} parent=0 // pred_check
    _
  $region11: #{spike_mlp_forward.1} parent=0 // pred_check_branch
    %17 = sbr.rel (0) target = $region13
  $region12: #{spike_mlp_forward.1} parent=0 // pred_region
    _
  $region13: #{spike_mlp_forward.1} parent=0 // pred_fallthru
    _
  // Predicated region
  $region14: #{spike_mlp_forward.1} parent=0 // pred_check
    _
  $region15: #{spike_mlp_forward.1} parent=0 // pred_check_branch
    %19 = sbr.rel (0) target = $region17
  $region16: #{spike_mlp_forward.1} parent=0 // pred_region
    _
  $region17: #{spike_mlp_forward.1} parent=0 // pred_fallthru
    _
  // Predicated region
  $region18: #{spike_mlp_forward.1} parent=0 // pred_check
    _
  $region19: #{spike_mlp_forward.1} parent=0 // pred_check_branch
    %21 = sbr.rel (0) target = $region21
  $region20: #{spike_mlp_forward.1} parent=0 // pred_region
    _
  $region21: #{spike_mlp_forward.1} parent=0 // pred_fallthru
    _
  // Predicated region
  $region22: #{spike_mlp_forward.1} parent=0 // pred_check
    _
  $region23: #{spike_mlp_forward.1} parent=0 // pred_check_branch
    %23 = sbr.rel (0) target = $region25
  $region24: #{spike_mlp_forward.1} parent=0 // pred_region
    _
  $region25: #{spike_mlp_forward.1} parent=0 // pred_fallthru
    _
  // Predicated region
  $region26: #{spike_mlp_forward.1} parent=0 // pred_check
    _
  $region27: #{spike_mlp_forward.1} parent=0 // pred_check_branch
    %25 = sbr.rel (0) target = $region29
  $region28: #{spike_mlp_forward.1} parent=0 // pred_region
    _
  $region29: #{spike_mlp_forward.1} parent=0 // pred_fallthru
    _
  %v29 = vld [vmem:[%s0] sm:$0xf]
  %v30 = vld [vmem:[%s0 + $0x4] sm:$0xf]
  %v31 = vld [vmem:[%s0 + $0x8] sm:$0xf]
  %v32 = vld [vmem:[%s0 + $0xc] sm:$0xf]
  %v33 = vld [vmem:[%s0 + $0x10] sm:$0xf]
  %v34 = vld [vmem:[%s0 + $0x14] sm:$0xf]
  %v35 = vld [vmem:[%s0 + $0x18] sm:$0xf]
  %v36 = vld [vmem:[%s0 + $0x1c] sm:$0xf]
  %v37 = vld [vmem:[%s1] sm:$0xf]
  %v38 = vld [vmem:[%s1 + $0x4] sm:$0xf]
  %v39 = vld [vmem:[%s1 + $0x8] sm:$0xf]
  %v40 = vld [vmem:[%s1 + $0xc] sm:$0xf]
  %v41 = vld [vmem:[%s1 + $0x10] sm:$0xf]
  %v42 = vld [vmem:[%s1 + $0x14] sm:$0xf]
  %v43 = vld [vmem:[%s1 + $0x18] sm:$0xf]
  %v44 = vld [vmem:[%s1 + $0x1c] sm:$0xf]
  %v45 = vld [vmem:[%s1 + $0x20] sm:$0xf]
  %v46 = vld [vmem:[%s1 + $0x24] sm:$0xf]
  %v47 = vld [vmem:[%s1 + $0x28] sm:$0xf]
  %v48 = vld [vmem:[%s1 + $0x2c] sm:$0xf]
  %v49 = vld [vmem:[%s1 + $0x30] sm:$0xf]
  %v50 = vld [vmem:[%s1 + $0x34] sm:$0xf]
  %v51 = vld [vmem:[%s1 + $0x38] sm:$0xf]
  %v52 = vld [vmem:[%s1 + $0x3c] sm:$0xf]
  %v53 = vld [vmem:[%s2] sm:$0x1]
  %v55 = vlaneseq
  %v56 = vshrl.u32 %v55, 7
  %v57 = vsub.s32 0, %v56
  %v58 = vrot.slane %v53, %v57
  %v68 = vunpack.c.l.b16 %v29
  %v69 = vunpack.c.l.b16 %v30
  %v70 = vunpack.c.l.b16 %v31
  %v71 = vunpack.c.l.b16 %v32
  %v72 = vunpack.c.l.b16 %v33
  %v73 = vunpack.c.l.b16 %v34
  %v74 = vunpack.c.l.b16 %v35
  %v75 = vunpack.c.l.b16 %v36
  %v76 = vpack.c.b16 %v69, %v68
  %v77 = vpack.c.b16 %v71, %v70
  %v78 = vpack.c.b16 %v73, %v72
  %v79 = vpack.c.b16 %v75, %v74
  %v100 = vunpack.c.l.b16 %v37
  %v101 = vunpack.c.l.b16 %v38
  %v102 = vunpack.c.l.b16 %v39
  %v103 = vunpack.c.l.b16 %v40
  %v104 = vunpack.c.l.b16 %v41
  %v105 = vunpack.c.l.b16 %v42
  %v106 = vunpack.c.l.b16 %v43
  %v107 = vunpack.c.l.b16 %v44
  %v108 = vunpack.c.l.b16 %v45
  %v109 = vunpack.c.l.b16 %v46
  %v110 = vunpack.c.l.b16 %v47
  %v111 = vunpack.c.l.b16 %v48
  %v112 = vunpack.c.l.b16 %v49
  %v113 = vunpack.c.l.b16 %v50
  %v114 = vunpack.c.l.b16 %v51
  %v115 = vunpack.c.l.b16 %v52
  %v116 = vpack.c.b16 %v101, %v100
  %v117 = vpack.c.b16 %v103, %v102
  %v118 = vpack.c.b16 %v105, %v104
  %v119 = vpack.c.b16 %v107, %v106
  %v120 = vpack.c.b16 %v109, %v108
  %v121 = vpack.c.b16 %v111, %v110
  %v122 = vpack.c.b16 %v113, %v112
  %v123 = vpack.c.b16 %v115, %v114
  %132 = vmatprep.subr.bf16.mxu0 0
  %133 = vmatpush1.bf16.msra.mxu0 %v116
  %134 = vmatprep.subr.bf16.mxu0 0
  %135 = vmatpush1.bf16.msra.mxu0 %v117
  %136 = vmatprep.subr.bf16.mxu0 0
  %137 = vmatpush1.bf16.msra.mxu0 %v118
  %138 = vmatprep.subr.bf16.mxu0 0
  %139 = vmatpush1.bf16.msra.mxu0 %v119
  %140 = vmatprep.subr.bf16.mxu0 0
  %141 = vmatpush1.bf16.msra.mxu0 %v120
  %142 = vmatprep.subr.bf16.mxu0 0
  %143 = vmatpush1.bf16.msra.mxu0 %v121
  %144 = vmatprep.subr.bf16.mxu0 0
  %145 = vmatpush1.bf16.msra.mxu0 %v122
  %146 = vmatprep.subr.bf16.mxu0 0
  %147 = vmatpush1.bf16.msra.mxu0 %v123
  %148 = vmatprep.subr.bf16.mxu0 0
  %149 = vmatpush1.bf16.msra.mxu0 0
  %150 = vmatprep.subr.bf16.mxu0 0
  %151 = vmatpush1.bf16.msra.mxu0 0
  %152 = vmatprep.subr.bf16.mxu0 0
  %153 = vmatpush1.bf16.msra.mxu0 0
  %154 = vmatprep.subr.bf16.mxu0 0
  %155 = vmatpush1.bf16.msra.mxu0 0
  %156 = vmatprep.subr.bf16.mxu0 0
  %157 = vmatpush1.bf16.msra.mxu0 0
  %158 = vmatprep.subr.bf16.mxu0 0
  %159 = vmatpush1.bf16.msra.mxu0 0
  %160 = vmatprep.subr.bf16.mxu0 0
  %161 = vmatpush1.bf16.msra.mxu0 0
  %162 = vmatprep.subr.bf16.mxu0 0
  %163 = vmatpush1.bf16.msra.mxu0 0
  %164 = vmatprep.mubr.bf16.mxu0 0
  %165 = vmatmul.mubr.bf16.gmra.mrb[0].mxu0 %v76
  %v166 = vpop.f32.mrb[0].mxu0
  %v167 = vadd.f32 %v58, %v166
  %v168 = vpop.f32.mrb[0].mxu0
  %v169 = vpop.f32.mrb[0].mxu0
  %v170 = vadd.f32 %v58, %v169
  %v171 = vpop.f32.mrb[0].mxu0
  %172 = vmatprep.mubr.bf16.mxu0 0
  %173 = vmatmul.mubr.bf16.gmra.mrb[0].mxu0 %v77
  %v174 = vpop.f32.mrb[0].mxu0
  %v175 = vadd.f32 %v58, %v174
  %v176 = vpop.f32.mrb[0].mxu0
  %v177 = vpop.f32.mrb[0].mxu0
  %v178 = vadd.f32 %v58, %v177
  %v179 = vpop.f32.mrb[0].mxu0
  %180 = vmatprep.mubr.bf16.mxu0 0
  %181 = vmatmul.mubr.bf16.gmra.mrb[0].mxu0 %v78
  %v182 = vpop.f32.mrb[0].mxu0
  %v183 = vadd.f32 %v58, %v182
  %v184 = vpop.f32.mrb[0].mxu0
  %v185 = vpop.f32.mrb[0].mxu0
  %v186 = vadd.f32 %v58, %v185
  %v187 = vpop.f32.mrb[0].mxu0
  %188 = vmatprep.mubr.bf16.mxu0 0
  %189 = vmatmul.mubr.bf16.gmra.mrb[0].mxu0 %v79
  %v190 = vpop.f32.mrb[0].mxu0
  %v191 = vadd.f32 %v58, %v190
  %v192 = vpop.f32.mrb[0].mxu0
  %v193 = vpop.f32.mrb[0].mxu0
  %v194 = vadd.f32 %v58, %v193
  %v195 = vpop.f32.mrb[0].mxu0
  %196 = vdwg.mxu0
  %197 = vst [vmem:[#allocation2] sm:$0xff] %v167
  %198 = vst [vmem:[#allocation2 + $0x8] sm:$0xff] %v170
  %199 = vst [vmem:[#allocation2 + $0x10] sm:$0xff] %v175
  %200 = vst [vmem:[#allocation2 + $0x18] sm:$0xff] %v178
  %201 = vst [vmem:[#allocation2 + $0x20] sm:$0xff] %v183
  %202 = vst [vmem:[#allocation2 + $0x28] sm:$0xff] %v186
  %203 = vst [vmem:[#allocation2 + $0x30] sm:$0xff] %v191
  %204 = vst [vmem:[#allocation2 + $0x38] sm:$0xff] %v194
  %205 = vst [vmem:[#allocation3] sm:$0xff] 0.0
  %206 = vst [vmem:[#allocation4] sm:$0xff] 0.0
  %207 = vst [vmem:[#allocation5] sm:$0xf] 0
  %208 = vst [vmem:[#allocation6] sm:$0xff] 0.0
  %209 = vst [vmem:[#allocation7] sm:$0xff] 0.0
  %210 = vst [vmem:[#allocation8] sm:$0xf] 0
  %211 = vst [vmem:[#allocation9] sm:$0xff] 0.0
  %212 = vst [vmem:[#allocation10] sm:$0xff] 0.0
  %213 = vst [vmem:[#allocation11] sm:$0xf] 0
  %214 = vst [vmem:[#allocation12] sm:$0xff] 0.0
  loop: start=0, step=1, limit=8
  $region30: #{spike_mlp_forward.1} parent=0 // loop_pre_header
    _
  $region31: #{spike_mlp_forward.1} parent=0 // loop_header
    %s216 = sphi 0, %s220
    %p217 = scmp.ge.s32.totalorder %s216, 8
  $region32: #{spike_mlp_forward.1} parent=0 // loop_header_branch
    %219 = sbr.rel (%p217) target = $region36
  $region33: #{spike_mlp_forward.1} parent=0 // loop_body
    %s221 = smul.u32 %s216, 8
    %s222 = scalar_lea.vmem [#allocation2], %s221
    %v223 = vld [vmem:[%s222] sm:$0xff]
    %v224 = vld [vmem:[#allocation3] sm:$0xff]
    %v225 = vmul.f32 %v224, 0.5
    %v226 = vadd.f32 %v225, %v223
    %v227 = vld [vmem:[#allocation5] sm:$0xf]
    %vm228 = vcmp.gt.bf16.partialorder %v227, 0
    %v229 = vld [vmem:[#allocation4] sm:$0xff]
    %v230 = vmul.f32 %v229, 0.75
    %v231 = vadd.f32 %v230, %v226
    %v232 = vsel %vm228, 65537, 0
    %v233 = vunpack.c.l.b16 %v232
    %vm234 = vcmp.ne.s32.totalorder %v233, 0
    %v235 = vsel %vm234, %v226, %v231
    %vm236 = vcmp.gt.f32.partialorder %v235, 0.5
    %v237 = vsel %vm236, 1, 0
    %v238 = vcvt.s32.f32 %v237
    %v239 = vpack.c.bf16 %v238, %v238
    %240 = vst [vmem:[#allocation3] sm:$0xff] %v226
    %241 = vst [vmem:[#allocation4] sm:$0xff] %v235
    %242 = vst [vmem:[#allocation5] sm:$0xf] %v239
    %v243 = vld [vmem:[%s3] sm:$0xf]
    %v244 = vld [vmem:[%s3 + $0x4] sm:$0xf]
    %v245 = vld [vmem:[%s3 + $0x8] sm:$0xf]
    %v246 = vld [vmem:[%s3 + $0xc] sm:$0xf]
    %v247 = vld [vmem:[%s3 + $0x10] sm:$0xf]
    %v248 = vld [vmem:[%s3 + $0x14] sm:$0xf]
    %v249 = vld [vmem:[%s3 + $0x18] sm:$0xf]
    %v250 = vld [vmem:[%s3 + $0x1c] sm:$0xf]
    %v251 = vld [vmem:[%s3 + $0x20] sm:$0xf]
    %v252 = vld [vmem:[%s3 + $0x24] sm:$0xf]
    %v253 = vld [vmem:[%s3 + $0x28] sm:$0xf]
    %v254 = vld [vmem:[%s3 + $0x2c] sm:$0xf]
    %v255 = vld [vmem:[%s3 + $0x30] sm:$0xf]
    %v256 = vld [vmem:[%s3 + $0x34] sm:$0xf]
    %v257 = vld [vmem:[%s3 + $0x38] sm:$0xf]
    %v258 = vld [vmem:[%s3 + $0x3c] sm:$0xf]
    %v259 = vld [vmem:[%s4] sm:$0x1]
    %v261 = vlaneseq
    %v262 = vshrl.u32 %v261, 7
    %v263 = vsub.s32 0, %v262
    %v264 = vrot.slane %v259, %v263
    %v282 = vunpack.c.l.b16 %v243
    %v283 = vunpack.c.l.b16 %v244
    %v284 = vunpack.c.l.b16 %v245
    %v285 = vunpack.c.l.b16 %v246
    %v286 = vunpack.c.l.b16 %v247
    %v287 = vunpack.c.l.b16 %v248
    %v288 = vunpack.c.l.b16 %v249
    %v289 = vunpack.c.l.b16 %v250
    %v290 = vunpack.c.l.b16 %v251
    %v291 = vunpack.c.l.b16 %v252
    %v292 = vunpack.c.l.b16 %v253
    %v293 = vunpack.c.l.b16 %v254
    %v294 = vunpack.c.l.b16 %v255
    %v295 = vunpack.c.l.b16 %v256
    %v296 = vunpack.c.l.b16 %v257
    %v297 = vunpack.c.l.b16 %v258
    %v298 = vpack.c.b16 %v283, %v282
    %v299 = vpack.c.b16 %v285, %v284
    %v300 = vpack.c.b16 %v287, %v286
    %v301 = vpack.c.b16 %v289, %v288
    %v302 = vpack.c.b16 %v291, %v290
    %v303 = vpack.c.b16 %v293, %v292
    %v304 = vpack.c.b16 %v295, %v294
    %v305 = vpack.c.b16 %v297, %v296
    %314 = vmatprep.subr.bf16.mxu0 0
    %315 = vmatpush1.bf16.msra.mxu0 %v298
    %316 = vmatprep.subr.bf16.mxu0 0
    %317 = vmatpush1.bf16.msra.mxu0 %v299
    %318 = vmatprep.subr.bf16.mxu0 0
    %319 = vmatpush1.bf16.msra.mxu0 %v300
    %320 = vmatprep.subr.bf16.mxu0 0
    %321 = vmatpush1.bf16.msra.mxu0 %v301
    %322 = vmatprep.subr.bf16.mxu0 0
    %323 = vmatpush1.bf16.msra.mxu0 %v302
    %324 = vmatprep.subr.bf16.mxu0 0
    %325 = vmatpush1.bf16.msra.mxu0 %v303
    %326 = vmatprep.subr.bf16.mxu0 0
    %327 = vmatpush1.bf16.msra.mxu0 %v304
    %328 = vmatprep.subr.bf16.mxu0 0
    %329 = vmatpush1.bf16.msra.mxu0 %v305
    %330 = vmatprep.subr.bf16.mxu0 0
    %331 = vmatpush1.bf16.msra.mxu0 0
    %332 = vmatprep.subr.bf16.mxu0 0
    %333 = vmatpush1.bf16.msra.mxu0 0
    %334 = vmatprep.subr.bf16.mxu0 0
    %335 = vmatpush1.bf16.msra.mxu0 0
    %336 = vmatprep.subr.bf16.mxu0 0
    %337 = vmatpush1.bf16.msra.mxu0 0
    %338 = vmatprep.subr.bf16.mxu0 0
    %339 = vmatpush1.bf16.msra.mxu0 0
    %340 = vmatprep.subr.bf16.mxu0 0
    %341 = vmatpush1.bf16.msra.mxu0 0
    %342 = vmatprep.subr.bf16.mxu0 0
    %343 = vmatpush1.bf16.msra.mxu0 0
    %344 = vmatprep.subr.bf16.mxu0 0
    %345 = vmatpush1.bf16.msra.mxu0 0
    %346 = vmatprep.mubr.bf16.mxu0 0
    %347 = vmatmul.mubr.bf16.gmra.mrb[0].mxu0 %v239
    %v348 = vpop.f32.mrb[0].mxu0
    %v349 = vadd.f32 %v264, %v348
    %v350 = vpop.f32.mrb[0].mxu0
    %v351 = vpop.f32.mrb[0].mxu0
    %v352 = vpop.f32.mrb[0].mxu0
    %353 = vdwg.mxu0
    %v354 = vld [vmem:[#allocation6] sm:$0xff]
    %v355 = vmul.f32 %v354, 0.5
    %v356 = vadd.f32 %v355, %v349
    %v357 = vld [vmem:[#allocation8] sm:$0xf]
    %vm358 = vcmp.gt.bf16.partialorder %v357, 0
    %v359 = vld [vmem:[#allocation7] sm:$0xff]
    %v360 = vmul.f32 %v359, 0.75
    %v361 = vadd.f32 %v360, %v356
    %v362 = vsel %vm358, 65537, 0
    %v363 = vunpack.c.l.b16 %v362
    %vm364 = vcmp.ne.s32.totalorder %v363, 0
    %v365 = vsel %vm364, %v356, %v361
    %vm366 = vcmp.gt.f32.partialorder %v365, 0.5
    %v367 = vsel %vm366, 1, 0
    %v368 = vcvt.s32.f32 %v367
    %v369 = vpack.c.bf16 %v368, %v368
    %370 = vst [vmem:[#allocation6] sm:$0xff] %v356
    %371 = vst [vmem:[#allocation7] sm:$0xff] %v365
    %372 = vst [vmem:[#allocation8] sm:$0xf] %v369
    %v373 = vld [vmem:[%s5] sm:$0xf]
    %v374 = vld [vmem:[%s5 + $0x4] sm:$0xf]
    %v375 = vld [vmem:[%s5 + $0x8] sm:$0xf]
    %v376 = vld [vmem:[%s5 + $0xc] sm:$0xf]
    %v377 = vld [vmem:[%s5 + $0x10] sm:$0xf]
    %v378 = vld [vmem:[%s5 + $0x14] sm:$0xf]
    %v379 = vld [vmem:[%s5 + $0x18] sm:$0xf]
    %v380 = vld [vmem:[%s5 + $0x1c] sm:$0xf]
    %v381 = vld [vmem:[%s5 + $0x20] sm:$0xf]
    %v382 = vld [vmem:[%s5 + $0x24] sm:$0xf]
    %v383 = vld [vmem:[%s5 + $0x28] sm:$0xf]
    %v384 = vld [vmem:[%s5 + $0x2c] sm:$0xf]
    %v385 = vld [vmem:[%s5 + $0x30] sm:$0xf]
    %v386 = vld [vmem:[%s5 + $0x34] sm:$0xf]
    %v387 = vld [vmem:[%s5 + $0x38] sm:$0xf]
    %v388 = vld [vmem:[%s5 + $0x3c] sm:$0xf]
    %v389 = vld [vmem:[%s6] sm:$0x1]
    %v391 = vlaneseq
    %v392 = vshrl.u32 %v391, 7
    %v393 = vsub.s32 0, %v392
    %v394 = vrot.slane %v389, %v393
    %v412 = vunpack.c.l.b16 %v373
    %v413 = vunpack.c.l.b16 %v374
    %v414 = vunpack.c.l.b16 %v375
    %v415 = vunpack.c.l.b16 %v376
    %v416 = vunpack.c.l.b16 %v377
    %v417 = vunpack.c.l.b16 %v378
    %v418 = vunpack.c.l.b16 %v379
    %v419 = vunpack.c.l.b16 %v380
    %v420 = vunpack.c.l.b16 %v381
    %v421 = vunpack.c.l.b16 %v382
    %v422 = vunpack.c.l.b16 %v383
    %v423 = vunpack.c.l.b16 %v384
    %v424 = vunpack.c.l.b16 %v385
    %v425 = vunpack.c.l.b16 %v386
    %v426 = vunpack.c.l.b16 %v387
    %v427 = vunpack.c.l.b16 %v388
    %v428 = vpack.c.b16 %v413, %v412
    %v429 = vpack.c.b16 %v415, %v414
    %v430 = vpack.c.b16 %v417, %v416
    %v431 = vpack.c.b16 %v419, %v418
    %v432 = vpack.c.b16 %v421, %v420
    %v433 = vpack.c.b16 %v423, %v422
    %v434 = vpack.c.b16 %v425, %v424
    %v435 = vpack.c.b16 %v427, %v426
    %444 = vmatprep.subr.bf16.mxu0 0
    %445 = vmatpush1.bf16.msra.mxu0 %v428
    %446 = vmatprep.subr.bf16.mxu0 0
    %447 = vmatpush1.bf16.msra.mxu0 %v429
    %448 = vmatprep.subr.bf16.mxu0 0
    %449 = vmatpush1.bf16.msra.mxu0 %v430
    %450 = vmatprep.subr.bf16.mxu0 0
    %451 = vmatpush1.bf16.msra.mxu0 %v431
    %452 = vmatprep.subr.bf16.mxu0 0
    %453 = vmatpush1.bf16.msra.mxu0 %v432
    %454 = vmatprep.subr.bf16.mxu0 0
    %455 = vmatpush1.bf16.msra.mxu0 %v433
    %456 = vmatprep.subr.bf16.mxu0 0
    %457 = vmatpush1.bf16.msra.mxu0 %v434
    %458 = vmatprep.subr.bf16.mxu0 0
    %459 = vmatpush1.bf16.msra.mxu0 %v435
    %460 = vmatprep.subr.bf16.mxu0 0
    %461 = vmatpush1.bf16.msra.mxu0 0
    %462 = vmatprep.subr.bf16.mxu0 0
    %463 = vmatpush1.bf16.msra.mxu0 0
    %464 = vmatprep.subr.bf16.mxu0 0
    %465 = vmatpush1.bf16.msra.mxu0 0
    %466 = vmatprep.subr.bf16.mxu0 0
    %467 = vmatpush1.bf16.msra.mxu0 0
    %468 = vmatprep.subr.bf16.mxu0 0
    %469 = vmatpush1.bf16.msra.mxu0 0
    %470 = vmatprep.subr.bf16.mxu0 0
    %471 = vmatpush1.bf16.msra.mxu0 0
    %472 = vmatprep.subr.bf16.mxu0 0
    %473 = vmatpush1.bf16.msra.mxu0 0
    %474 = vmatprep.subr.bf16.mxu0 0
    %475 = vmatpush1.bf16.msra.mxu0 0
    %476 = vmatprep.mubr.bf16.mxu0 0
    %477 = vmatmul.mubr.bf16.gmra.mrb[0].mxu0 %v369
    %v478 = vpop.f32.mrb[0].mxu0
    %v479 = vadd.f32 %v394, %v478
    %v480 = vpop.f32.mrb[0].mxu0
    %v481 = vpop.f32.mrb[0].mxu0
    %v482 = vpop.f32.mrb[0].mxu0
    %483 = vdwg.mxu0
    %v484 = vld [vmem:[#allocation9] sm:$0xff]
    %v485 = vmul.f32 %v484, 0.5
    %v486 = vadd.f32 %v485, %v479
    %v487 = vld [vmem:[#allocation11] sm:$0xf]
    %vm488 = vcmp.gt.bf16.partialorder %v487, 0
    %v489 = vld [vmem:[#allocation10] sm:$0xff]
    %v490 = vmul.f32 %v489, 0.75
    %v491 = vadd.f32 %v490, %v486
    %v492 = vsel %vm488, 65537, 0
    %v493 = vunpack.c.l.b16 %v492
    %vm494 = vcmp.ne.s32.totalorder %v493, 0
    %v495 = vsel %vm494, %v486, %v491
    %vm496 = vcmp.gt.f32.partialorder %v495, 0.5
    %v497 = vsel %vm496, 1, 0
    %v498 = vcvt.s32.f32 %v497
    %v499 = vpack.c.bf16 %v498, %v498
    %500 = vst [vmem:[#allocation9] sm:$0xff] %v486
    %501 = vst [vmem:[#allocation10] sm:$0xff] %v495
    %502 = vst [vmem:[#allocation11] sm:$0xf] %v499
    %v503 = vld [vmem:[#allocation12] sm:$0xff]
    %v504 = vunpack.c.l.bf16 %v499
    %v505 = vadd.f32 %v503, %v504
    %506 = vst [vmem:[#allocation12] sm:$0xff] %v505
  $region34: #{spike_mlp_forward.1} parent=0 // loop_footer
    %s220 = sadd.s32 1, %s216
  $region35: #{spike_mlp_forward.1} parent=0 // loop_footer_branch
    %215 = sbr.rel target = $region31
  $region36: #{spike_mlp_forward.1} parent=0 // loop_exit
    _
  %v507 = vld [vmem:[#allocation12] sm:$0xff]
  %v508 = vmul.f32 %v507, 0.125
  %509 = vst [vmem:[%s7] sm:$0xff] %v508
  // Predicated region
  $region37: #{spike_mlp_forward.1} parent=0 // pred_check
    _
  $region38: #{spike_mlp_forward.1} parent=0 // pred_check_branch
    %511 = sbr.rel (0) target = $region40
  $region39: #{spike_mlp_forward.1} parent=0 // pred_region
    _
  $region40: #{spike_mlp_forward.1} parent=0 // pred_fallthru
    _
  // Predicated region
  $region41: #{spike_mlp_forward.1} parent=0 // pred_check
    _
  $region42: #{spike_mlp_forward.1} parent=0 // pred_check_branch
    %513 = sbr.rel (0) target = $region44
  $region43: #{spike_mlp_forward.1} parent=0 // pred_region
    _
  $region44: #{spike_mlp_forward.1} parent=0 // pred_fallthru
    _

</llo_original>
